<compile_context>
chip_gen: v5e
topology: v5e:2x2
jax: 0.10.0
libtpu: 0.0.40
codegen_flags: <defaults>
</compile_context>

<pallas_src>
import jax
import jax.numpy as jnp
from jax.experimental import pallas as pl
from jax.experimental.pallas import tpu as pltpu


def _adjust_gamma_kernel(params_ref, x_ref, o_ref):
    # params_ref: SMEM, shape (2,): [gamma, log(gain)]
    gamma = params_ref[0]
    log_gain = params_ref[1]

    x = x_ref[...]
    # x ** gamma * gain via exp(gamma * log(x) + log(gain)); guard x <= 0 -> 0.
    # For x == 0 this matches torch (0**gamma == 0 since gamma in [0.3, 0.9] > 0);
    # negative pixels map to 0 instead of NaN (inputs are [0, 1] images).
    pos = x > 0.0
    safe_x = jnp.where(pos, x, 1.0)
    out = jnp.where(pos, jnp.exp(gamma * jnp.log(safe_x) + log_gain), 0.0)
    o_ref[...] = jnp.clip(out, 0.0, 1.0).astype(o_ref.dtype)


def adjust_gamma_pallas(image: jax.Array, gamma: jax.Array, gain: jax.Array,
                        *, lanes: int = 1024, block_bytes: int = 4 << 20) -> jax.Array:
    """image: (N, C, H, W) float in [0, 1]. Returns same shape/dtype."""
    orig_shape = image.shape
    orig_dtype = image.dtype
    total = int(image.size)
    itemsize = jnp.dtype(orig_dtype).itemsize

    # Lane-dense slab: K = 1024 lanes (multiple of 128), M rows.
    K = lanes
    M = -(-total // K)

    # Row tile sized by byte budget (~4 MiB), rounded down to a multiple of 8.
    max_rows = max(8, (block_bytes // (K * itemsize)) // 8 * 8)
    if M <= max_rows:
        tile_rows = M            # single block: first dim == full extent is allowed
        padded_rows = M
    else:
        tile_rows = max_rows     # multiple of 8
        padded_rows = -(-M // tile_rows) * tile_rows

    padded_total = padded_rows * K
    flat = image.reshape(-1)
    if padded_total != total:
        flat = jnp.pad(flat, (0, padded_total - total))
    x2d = flat.reshape(padded_rows, K)

    # Scalars in SMEM: [gamma, log(gain)] (gain > 0 in the documented range).
    params = jnp.stack([gamma.astype(jnp.float32),
                        jnp.log(gain.astype(jnp.float32))])

    grid = (padded_rows // tile_rows,)

    out2d = pl.pallas_call(
        _adjust_gamma_kernel,
        out_shape=jax.ShapeDtypeStruct((padded_rows, K), orig_dtype),
        grid=grid,
        in_specs=[
            pl.BlockSpec(memory_space=pltpu.MemorySpace.SMEM),     # gamma / log(gain)
            pl.BlockSpec((tile_rows, K), lambda i: (i, 0)),        # image tile
        ],
        out_specs=pl.BlockSpec((tile_rows, K), lambda i: (i, 0)),
        compiler_params=pltpu.CompilerParams(
            dimension_semantics=("parallel",),
            vmem_limit_bytes=32 << 20,
        ),
    )(params, x2d)

    # Drop padding (never let padded lanes leak into the output), restore shape.
    return out2d.reshape(-1)[:total].reshape(orig_shape)


def adjust_gamma_ref(image, gamma, gain):
    return jnp.clip(gain * jnp.power(image, gamma), 0.0, 1.0)


if __name__ == "__main__":
    key = jax.random.PRNGKey(0)
    k_img, k_gamma, k_gain = jax.random.split(key, 3)

    # Module __init__ defaults: gamma in [0.3, 0.9], gain in [0.5, 1.2]
    gamma_low, gamma_high = 0.3, 0.9
    gain_low, gain_high = 0.5, 1.2
    gamma = jax.random.uniform(k_gamma, (), minval=max(0.0, gamma_low),
                               maxval=min(1.0, gamma_high))
    gain = jax.random.uniform(k_gain, (), minval=max(0.5, gain_low),
                              maxval=min(1.5, gain_high))

    # NCHW image, values in [0, 1]
    image = jax.random.uniform(k_img, (2, 4, 16, 16), dtype=jnp.float32)

    out = adjust_gamma_pallas(image, gamma, gain)
    out = jax.block_until_ready(out)

    ref = adjust_gamma_ref(image, gamma, gain)
    assert out.shape == image.shape and out.dtype == image.dtype
    assert jnp.allclose(out, ref, atol=1e-5, rtol=1e-5), "mismatch vs reference"

    # Also exercise the padding path (H*W not a multiple of the lane width).
    image2 = jax.random.uniform(jax.random.PRNGKey(1), (1, 3, 15, 15), dtype=jnp.float32)
    out2 = jax.block_until_ready(adjust_gamma_pallas(image2, gamma, gain))
    ref2 = adjust_gamma_ref(image2, gamma, gain)
    assert out2.shape == image2.shape
    assert jnp.allclose(out2, ref2, atol=1e-5, rtol=1e-5), "mismatch (padded path)"

    print("KERNEL_OK")
</pallas_src>

<mosaic_0001>
module attributes {stable_mosaic.version = 11 : i64} {
  func.func @_adjust_gamma_kernel(%arg0: i32, %arg1: memref<2xf32, #tpu.memory_space<smem>>, %arg2: memref<2x1024xf32, #tpu.memory_space<vmem>>, %arg3: memref<2x1024xf32, #tpu.memory_space<vmem>>) attributes {dimension_semantics = [#tpu.dimension_semantics<parallel>], iteration_bounds = array<i64: 1>, scalar_prefetch = 0 : i64, scratch_operands = 0 : i64, tpu.core_type = #tpu.core_type<tc>, window_params = [{transform_indices = @transform_0, window_bounds = array<i64: 2>}, {transform_indices = @transform_1, window_bounds = array<i64: 2, 1024>}, {transform_indices = @transform_2, window_bounds = array<i64: 2, 1024>}]} {
    %c0 = arith.constant 0 : index
    %0 = memref.load %arg1[%c0] : memref<2xf32, #tpu.memory_space<smem>>
    %c1 = arith.constant 1 : index
    %1 = memref.load %arg1[%c1] : memref<2xf32, #tpu.memory_space<smem>>
    %c0_0 = arith.constant 0 : index
    %c0_1 = arith.constant 0 : index
    %2 = vector.load %arg2[%c0_0, %c0_1] : memref<2x1024xf32, #tpu.memory_space<vmem>>, vector<2x1024xf32>
    %cst = arith.constant 0.000000e+00 : f32
    %3 = vector.broadcast %cst : f32 to vector<2x1024xf32>
    %4 = arith.cmpf ogt, %2, %3 : vector<2x1024xf32>
    %cst_2 = arith.constant 1.000000e+00 : f32
    %5 = vector.broadcast %cst_2 : f32 to vector<2x1024xf32>
    %6 = arith.select %4, %2, %5 : vector<2x1024xi1>, vector<2x1024xf32>
    %7 = math.log %6 : vector<2x1024xf32>
    %8 = vector.broadcast %0 : f32 to vector<2x1024xf32>
    %9 = arith.mulf %8, %7 : vector<2x1024xf32>
    %10 = vector.broadcast %1 : f32 to vector<2x1024xf32>
    %11 = arith.addf %9, %10 : vector<2x1024xf32>
    %12 = math.exp %11 : vector<2x1024xf32>
    %cst_3 = arith.constant 0.000000e+00 : f32
    %13 = vector.broadcast %cst_3 : f32 to vector<2x1024xf32>
    %14 = arith.select %4, %12, %13 : vector<2x1024xi1>, vector<2x1024xf32>
    %cst_4 = arith.constant 0.000000e+00 : f32
    %cst_5 = arith.constant 1.000000e+00 : f32
    %15 = vector.broadcast %cst_4 : f32 to vector<2x1024xf32>
    %16 = arith.maximumf %15, %14 : vector<2x1024xf32>
    %17 = vector.broadcast %cst_5 : f32 to vector<2x1024xf32>
    %18 = arith.minimumf %17, %16 : vector<2x1024xf32>
    %c0_6 = arith.constant 0 : index
    %c0_7 = arith.constant 0 : index
    %19 = vector.load %arg3[%c0_6, %c0_7] : memref<2x1024xf32, #tpu.memory_space<vmem>>, vector<2x1024xf32>
    tpu.vector_store %arg3[%c0_6, %c0_7], %18 {strides = array<i32>} : memref<2x1024xf32, #tpu.memory_space<vmem>>, vector<2x1024xf32>,
    return
  }
  func.func @transform_0(%arg0: i32) -> i32 {
    %c0_i32 = arith.constant 0 : i32
    %c0_i32_0 = arith.constant 0 : i32
    return %c0_i32 : i32
  }
  func.func @transform_1(%arg0: i32) -> (i32, i32) {
    %c0_i32 = arith.constant 0 : i32
    %c0_i32_0 = arith.constant 0 : i32
    return %arg0, %c0_i32 : i32, i32
  }
  func.func @transform_2(%arg0: i32) -> (i32, i32) {
    %c0_i32 = arith.constant 0 : i32
    %c0_i32_0 = arith.constant 0 : i32
    return %arg0, %c0_i32 : i32, i32
  }
}

</mosaic_0001>

<llo_original>
// kernel: tpu_custom_call.1
$region0: #{tpu_custom_call.1}
  #allocation0 [shape = 'u32[]', space=smem, size = 0x4, offset = 0x4, fixed_abs, tag = 'smem constant byte address 0x4 - core index']
  #allocation1 [shape = 'u32[72,128]{1,0:T(1,128)}', space=vmem, size = 0x9000, scoped, tag = 'internal scratch']
  %s0 = inlined_call_operand.hbm [shape: f32[2], index: 0, kind: input, shape index: {}]
  %s1 = inlined_call_operand.hbm [shape: f32[2,1024], index: 1, kind: input, shape index: {}]
  %s2 = inlined_call_operand.hbm [shape: f32[2,1024], index: 2, kind: output, shape index: {}]
  %s3 = sld [smem:[#allocation0]]
  $region26: #{tpu_custom_call.1} parent=0
    _
  %s5 = ssub.s32 1, %s3
  %s6 = scalar_select 0, %s5, %s3
  $region1: #{tpu_custom_call.1} parent=0
    #allocation2 [shape = 'u8[512]{0}', space=smem, size = 0x200, scoped, tag = 'input window, operand 0, single buffered']
    #allocation3 [shape = 's32[1]{0}', space=sflag, size = 0x4, scoped, tag = 'scoped memory for tpu_custom_call.1']
    #allocation4 [shape = 's32[1]{0}', space=sflag, size = 0x4, scoped, tag = 'scoped memory for tpu_custom_call.1']
    #allocation5 [shape = 's32[1]{0}', space=sflag, size = 0x4, scoped, tag = 'scoped memory for tpu_custom_call.1']
    #allocation6 [shape = 'u8[8192]{0}', space=vmem, size = 0x2000, scoped, tag = 'input window, operand 1, single buffered']
    #allocation7 [shape = 'u8[8192]{0}', space=vmem, size = 0x2000, scoped, tag = 'output window, operand 0, single buffered']
    %7 = vsyncpa [#allocation5], 0
    %8 = vsyncpa [#allocation3], 0
    %9 = vsyncpa [#allocation4], 0
    // Predicated region
    $region2: #{tpu_custom_call.1} parent=1 // pred_check
      _
    $region3: #{tpu_custom_call.1} parent=1 // pred_check_branch
      %11 = sbr.rel (0) target = $region5
    $region4: #{tpu_custom_call.1} parent=1 // pred_region
      %13 = vsyncadd [#allocation5], 0
      %s15 = sshll.u32 %s0, 4
      %s16 = int_to_ptr.hbm [resolvable:$true] %s15
      %18 = dma.hbm_to_smem %s16, 16, [#allocation2], [#allocation5]
    $region5: #{tpu_custom_call.1} parent=1 // pred_fallthru
      _
    // Predicated region
    $region6: #{tpu_custom_call.1} parent=1 // pred_check
      _
    $region7: #{tpu_custom_call.1} parent=1 // pred_check_branch
      %20 = sbr.rel (0) target = $region9
    $region8: #{tpu_custom_call.1} parent=1 // pred_region
      %22 = vsyncadd [#allocation3], 0
      %s24 = sshll.u32 %s1, 4
      %s25 = int_to_ptr.hbm [resolvable:$true] %s24
      %s26 = sshll.u32 [#allocation6], 4
      %s27 = int_to_ptr.vmem [resolvable:$true] %s26
      %29 = dma.hbm_to_vmem [thread:$0]  %s25, 256, %s27, [#allocation3]
    $region9: #{tpu_custom_call.1} parent=1 // pred_fallthru
      _
    // Predicated region
    $region10: #{tpu_custom_call.1} parent=1 // pred_check
      _
    $region11: #{tpu_custom_call.1} parent=1 // pred_check_branch
      %31 = sbr.rel (0) target = $region13
    $region12: #{tpu_custom_call.1} parent=1 // pred_region
      %33 = dma.done [#allocation5], 16
    $region13: #{tpu_custom_call.1} parent=1 // pred_fallthru
      _
    // Predicated region
    $region14: #{tpu_custom_call.1} parent=1 // pred_check
      _
    $region15: #{tpu_custom_call.1} parent=1 // pred_check_branch
      %35 = sbr.rel (0) target = $region17
    $region16: #{tpu_custom_call.1} parent=1 // pred_region
      %37 = dma.done [#allocation3], 256
    $region17: #{tpu_custom_call.1} parent=1 // pred_fallthru
      _
    %38 = sfence
    %s39 = sld [smem:[#allocation2]]
    %s40 = sld [smem:[#allocation2 + $0x1]]
    %v41 = vld [vmem:[#allocation6] sm:$0xff]
    %v42 = vld [vmem:[#allocation6 + $0x8] sm:$0xff]
    %vm43 = vcmp.gt.f32.partialorder %v41, 0.0
    %vm44 = vcmp.gt.f32.partialorder %v42, 0.0
    %v45 = vsel %vm43, %v41, 1.0
    %v46 = vsel %vm44, %v42, 1.0
    %v47 = vlog2.pop %v45
    %v48 = vmul.f32 %v47, 0.6931472
    %v49 = vlog2.pop %v46
    %v50 = vmul.f32 %v49, 0.6931472
    %v51 = vstv %s39
    %v52 = vmul.f32 %v51, %v48
    %v53 = vmul.f32 %v51, %v50
    %v54 = vstv %s40
    %v55 = vadd.f32 %v52, %v54
    %v56 = vadd.f32 %v53, %v54
    %v57 = vmul.f32 %v55, 1.442695
    %v58 = vpow.pop %v57
    %v59 = vmul.f32 %v56, 1.442695
    %v60 = vpow.pop %v59
    %v61 = vsel %vm43, %v58, 0.0
    %v62 = vsel %vm44, %v60, 0.0
    %v63 = vmax.f32 %v61, 0.0
    %v64 = vmax.f32 %v62, 0.0
    %v65 = vmin.f32 %v63, 1.0
    %v66 = vmin.f32 %v64, 1.0
    %67 = vst [vmem:[#allocation7] sm:$0xff] %v65
    %68 = vst [vmem:[#allocation7 + $0x8] sm:$0xff] %v66
    // Predicated region
    $region18: #{tpu_custom_call.1} parent=1 // pred_check
      _
    $region19: #{tpu_custom_call.1} parent=1 // pred_check_branch
      %70 = sbr.rel (0) target = $region21
    $region20: #{tpu_custom_call.1} parent=1 // pred_region
      %72 = vsyncadd [#allocation4], 0
      %s74 = sshll.u32 [#allocation7], 4
      %s75 = int_to_ptr.vmem [resolvable:$true] %s74
      %s76 = sshll.u32 %s2, 4
      %s77 = int_to_ptr.hbm [resolvable:$true] %s76
      %79 = dma.vmem_to_hbm [thread:$0]  %s75, 256, %s77, [#allocation4]
    $region21: #{tpu_custom_call.1} parent=1 // pred_fallthru
      _
    // Predicated region
    $region22: #{tpu_custom_call.1} parent=1 // pred_check
      _
    $region23: #{tpu_custom_call.1} parent=1 // pred_check_branch
      %81 = sbr.rel (0) target = $region25
    $region24: #{tpu_custom_call.1} parent=1 // pred_region
      %83 = dma.done [#allocation4], 256
    $region25: #{tpu_custom_call.1} parent=1 // pred_fallthru
      _
    %84 = vsyncpa [#allocation3], 1
    %85 = vsyncpa [#allocation4], 1
    %86 = vsyncpa [#allocation5], 1

</llo_original>
